<compile_context>
chip_gen: v6e
topology: v6e:2x2x1
jax: 0.10.0
libtpu: 0.0.40
codegen_flags: <defaults>
</compile_context>

<pallas_src>
import jax
import jax.numpy as jnp
from jax.experimental import pallas as pl
from jax.experimental.pallas import tpu as pltpu

_NEG_LARGE = -1e30  # finite "masked" sentinel; exp() underflows to 0 like -inf


def _pool_body(x_ref, w_ref, b_ref, out_ref, mask_ref):
    x = x_ref[...]                                      # (TB, T, D), native dtype
    w = w_ref[...].astype(x.dtype)                      # (1, D)

    # scores = Linear(x): in-dtype VPU multiply, f32 lane-reduce over D -> (TB, T)
    # TODO(synk): on v7x the score pass could go to the otherwise-idle MXU
    # ((TB*T, D) @ (D,128)-padded w); the VPU path is kept for portability.
    scores = jnp.sum(x * w[None, :, :], axis=-1, dtype=jnp.float32) + b_ref[0]
    if mask_ref is not None:
        scores = jnp.where(mask_ref[...] != 0, scores, _NEG_LARGE)

    # softmax over T (lane axis, lane-dense (TB, T))
    mx = jnp.max(scores, axis=-1, keepdims=True)        # (TB, 1)
    e = jnp.exp(scores - mx)                            # (TB, T)
    denom = jnp.sum(e, axis=-1, keepdims=True)          # (TB, 1)
    weights = e * pl.reciprocal(denom, approx=True)     # EUP slot, ~free

    # pooled = sum_T weights * x, f32 accumulation -> (TB, D)
    pooled = jnp.sum(weights.astype(x.dtype)[:, :, None] * x, axis=1,
                     dtype=jnp.float32)
    out_ref[...] = pooled.astype(out_ref.dtype)


def _kernel_masked(x_ref, w_ref, b_ref, m_ref, out_ref):
    _pool_body(x_ref, w_ref, b_ref, out_ref, mask_ref=m_ref)


def _kernel_nomask(x_ref, w_ref, b_ref, out_ref):
    _pool_body(x_ref, w_ref, b_ref, out_ref, mask_ref=None)


def _round_up(n, m):
    return ((n + m - 1) // m) * m


def _vmem_budget():
    """(x-block byte budget, vmem_limit_bytes), generation-aware.

    Per-step accounting (x block of Bx bytes, f32 worst case):
      2*Bx double-buffered x input + ~1*Bx in-dtype (TB,T,D) product temp
      + mask (TB,T) i32 + scores/weights (TB,T) f32 + out (TB,D)   (small)
    => ~3*Bx must fit under vmem_limit with headroom.
    """
    try:
        cap = pltpu.get_tpu_info().vmem_capacity_bytes
    except Exception:
        cap = 64 << 20                  # conservative fallback
    if cap <= (64 << 20):               # v7x-class: 64 MiB VMEM per TensorCore
        return 6 << 20, 48 << 20
    return 12 << 20, 80 << 20           # v5e / v6e: 128 MiB physical VMEM


def _pick_batch_tile(B, T, D, itemsize, x_block_budget):
    """Rows (TB) per grid step.  TB is a multiple of 8 (sublane rule on the
    (TB, D) output block) unless TB == B; the block count is kept even where
    possible so v7x's two TensorCores split the 'parallel' axis evenly."""
    if B <= 8:
        return B
    bytes_per_row = max(1, T * D * itemsize)
    rows = min(B, max(8, x_block_budget // bytes_per_row))
    tb = max(8, (rows // 8) * 8)
    nblk = pl.cdiv(B, tb)
    if nblk % 2 == 1:
        nblk += 1                       # prefer an even number of blocks
    tb = min(tb, _round_up(pl.cdiv(B, nblk), 8))
    return max(8, tb)


def attn_pooling(x, weight, bias, mask=None):
    """Pallas AttnPooling.

    Args:
      x:      (B, T, D) float32 or bfloat16
      weight: (D, 1)    nn.Linear(dim, 1).weight transposed
      bias:   scalar / (1,)
      mask:   optional (B, T) bool, True = keep
    Returns:
      (B, D) pooled tensor in x's dtype.
    """
    B, T, D = x.shape
    x_budget, vmem_limit = _vmem_budget()
    TB = _pick_batch_tile(B, T, D, jnp.dtype(x.dtype).itemsize, x_budget)

    w_row = jnp.asarray(weight).reshape(1, D)
    b_arr = jnp.asarray(bias, dtype=jnp.float32).reshape(1)

    grid = (pl.cdiv(B, TB),)            # no padding: tail-block writes are masked
    x_spec = pl.BlockSpec((TB, T, D), lambda i: (i, 0, 0))
    w_spec = pl.BlockSpec((1, D), lambda i: (0, 0))
    b_spec = pl.BlockSpec(memory_space=pltpu.MemorySpace.SMEM)
    out_spec = pl.BlockSpec((TB, D), lambda i: (i, 0))
    # NOTE: for D < 128 the output stores are lane-masked; output bytes are
    # << input bytes, so this is left as-is (production D is typically >= 128).
    cparams = pltpu.CompilerParams(
        dimension_semantics=("parallel",),
        vmem_limit_bytes=vmem_limit,
    )
    out_shape = jax.ShapeDtypeStruct((B, D), x.dtype)

    if mask is None:
        return pl.pallas_call(
            _kernel_nomask,
            out_shape=out_shape,
            grid_spec=pltpu.PrefetchScalarGridSpec(
                num_scalar_prefetch=0, grid=grid,
                in_specs=[x_spec, w_spec, b_spec],
                out_specs=out_spec),
            compiler_params=cparams,
        )(x, w_row, b_arr)

    m_i32 = jnp.asarray(mask).astype(jnp.int32)     # raw 0/1; select in-kernel
    m_spec = pl.BlockSpec((TB, T), lambda i: (i, 0))
    return pl.pallas_call(
        _kernel_masked,
        out_shape=out_shape,
        grid_spec=pltpu.PrefetchScalarGridSpec(
            num_scalar_prefetch=0, grid=grid,
            in_specs=[x_spec, w_spec, b_spec, m_spec],
            out_specs=out_spec),
        compiler_params=cparams,
    )(x, w_row, b_arr, m_i32)


def _reference(x, weight, bias, mask=None):
    scores = jnp.einsum("btd,do->bto", x, weight)[..., 0] + bias   # (B, T)
    if mask is not None:
        scores = jnp.where(mask, scores, -jnp.inf)
    w = jax.nn.softmax(scores, axis=1)[..., None]                  # (B, T, 1)
    return jnp.sum(w * x, axis=1)                                  # (B, D)


def _check(B, T, D, key):
    kx, kw, kb, km = jax.random.split(key, 4)
    x = jax.random.normal(kx, (B, T, D), dtype=jnp.float32)
    weight = jax.random.normal(kw, (D, 1), dtype=jnp.float32) * 0.1
    bias = jax.random.normal(kb, (1,), dtype=jnp.float32) * 0.1
    # Boolean mask (True = keep); ensure at least one True per row.
    mask = jax.random.bernoulli(km, 0.7, (B, T)).at[:, 0].set(True)

    # approx reciprocal on the EUP => ~1e-4 relative error budget.
    out = jax.block_until_ready(attn_pooling(x, weight, bias, mask))
    ref = _reference(x, weight, bias[0], mask)
    assert out.shape == (B, D)
    assert jnp.allclose(out, ref, atol=2e-3, rtol=2e-3), (out, ref)

    out_nm = jax.block_until_ready(attn_pooling(x, weight, bias))
    ref_nm = _reference(x, weight, bias[0])
    assert jnp.allclose(out_nm, ref_nm, atol=2e-3, rtol=2e-3), (out_nm, ref_nm)


if __name__ == "__main__":
    key = jax.random.PRNGKey(0)
    k0, k1 = jax.random.split(key)
    # Small shape matching the module spec (B, T, D), single grid block.
    _check(B=2, T=8, D=32, key=k0)
    # Larger batch: exercises the even-block split (TB=16, grid=2) and the
    # unpadded ragged tail block (20 = 16 + 4, masked tail writes).
    _check(B=20, T=8, D=32, key=k1)
    print("KERNEL_OK")
</pallas_src>

<mosaic_0001>
module attributes {stable_mosaic.version = 11 : i64} {
  func.func @_kernel_masked(%arg0: i32, %arg1: memref<2x8x32xf32, #tpu.memory_space<vmem>>, %arg2: memref<1x32xf32, #tpu.memory_space<vmem>>, %arg3: memref<1xf32, #tpu.memory_space<smem>>, %arg4: memref<2x8xi32, #tpu.memory_space<vmem>>, %arg5: memref<2x32xf32, #tpu.memory_space<vmem>>) attributes {dimension_semantics = [#tpu.dimension_semantics<parallel>], iteration_bounds = array<i64: 1>, scalar_prefetch = 0 : i64, scratch_operands = 0 : i64, tpu.core_type = #tpu.core_type<tc>, window_params = [{transform_indices = @transform_0, window_bounds = array<i64: 2, 8, 32>}, {pipeline_mode = #tpu.pipeline_mode<synchronous>, transform_indices = @transform_1, window_bounds = array<i64: 1, 32>}, {transform_indices = @transform_2, window_bounds = array<i64: 1>}, {transform_indices = @transform_3, window_bounds = array<i64: 2, 8>}, {transform_indices = @transform_4, window_bounds = array<i64: 2, 32>}]} {
    %c0 = arith.constant 0 : index
    %c0_0 = arith.constant 0 : index
    %c0_1 = arith.constant 0 : index
    %0 = vector.load %arg1[%c0, %c0_0, %c0_1] : memref<2x8x32xf32, #tpu.memory_space<vmem>>, vector<2x8x32xf32>
    %c0_2 = arith.constant 0 : index
    %c0_3 = arith.constant 0 : index
    %1 = vector.load %arg2[%c0_2, %c0_3] : memref<1x32xf32, #tpu.memory_space<vmem>>, vector<1x32xf32>
    %2 = vector.shape_cast %1 : vector<1x32xf32> to vector<1x1x32xf32>
    %3 = vector.broadcast %2 : vector<1x1x32xf32> to vector<2x8x32xf32>
    %4 = arith.mulf %0, %3 : vector<2x8x32xf32>
    %cst = arith.constant dense<0.000000e+00> : vector<2x8xf32>
    %5 = vector.multi_reduction <add>, %4, %cst [2] : vector<2x8x32xf32> to vector<2x8xf32>
    %c0_4 = arith.constant 0 : index
    %6 = memref.load %arg3[%c0_4] : memref<1xf32, #tpu.memory_space<smem>>
    %7 = vector.broadcast %6 : f32 to vector<2x8xf32>
    %8 = arith.addf %5, %7 : vector<2x8xf32>
    %c0_5 = arith.constant 0 : index
    %c0_6 = arith.constant 0 : index
    %9 = vector.load %arg4[%c0_5, %c0_6] : memref<2x8xi32, #tpu.memory_space<vmem>>, vector<2x8xi32>
    %c0_i32 = arith.constant 0 : i32
    %10 = vector.broadcast %c0_i32 : i32 to vector<2x8xi32>
    %11 = arith.cmpi ne, %9, %10 : vector<2x8xi32>
    %cst_7 = arith.constant -1.000000e+30 : f32
    %12 = vector.broadcast %cst_7 : f32 to vector<2x8xf32>
    %13 = arith.select %11, %8, %12 : vector<2x8xi1>, vector<2x8xf32>
    %cst_8 = arith.constant dense<0xFF800000> : vector<2xf32>
    %14 = vector.multi_reduction <maximumf>, %13, %cst_8 [1] : vector<2x8xf32> to vector<2xf32>
    %15 = vector.shape_cast %14 : vector<2xf32> to vector<2x1xf32>
    %16 = vector.broadcast %15 : vector<2x1xf32> to vector<2x8xf32>
    %17 = arith.subf %13, %16 : vector<2x8xf32>
    %18 = math.exp %17 : vector<2x8xf32>
    %cst_9 = arith.constant dense<0.000000e+00> : vector<2xf32>
    %19 = vector.multi_reduction <add>, %18, %cst_9 [1] : vector<2x8xf32> to vector<2xf32>
    %20 = vector.shape_cast %19 : vector<2xf32> to vector<2x1xf32>
    %21 = tpu.reciprocal %20 {approx = true} : vector<2x1xf32> -> vector<2x1xf32>
    %22 = vector.broadcast %21 : vector<2x1xf32> to vector<2x8xf32>
    %23 = arith.mulf %18, %22 : vector<2x8xf32>
    %24 = vector.shape_cast %23 : vector<2x8xf32> to vector<2x8x1xf32>
    %25 = vector.broadcast %24 : vector<2x8x1xf32> to vector<2x8x32xf32>
    %26 = arith.mulf %25, %0 : vector<2x8x32xf32>
    %cst_10 = arith.constant dense<0.000000e+00> : vector<2x32xf32>
    %27 = vector.multi_reduction <add>, %26, %cst_10 [1] : vector<2x8x32xf32> to vector<2x32xf32>
    %c0_11 = arith.constant 0 : index
    %c0_12 = arith.constant 0 : index
    %28 = vector.load %arg5[%c0_11, %c0_12] : memref<2x32xf32, #tpu.memory_space<vmem>>, vector<2x32xf32>
    tpu.vector_store %arg5[%c0_11, %c0_12], %27 {strides = array<i32>} : memref<2x32xf32, #tpu.memory_space<vmem>>, vector<2x32xf32>,
    return
  }
  func.func @transform_0(%arg0: i32) -> (i32, i32, i32) {
    %c0_i32 = arith.constant 0 : i32
    %c0_i32_0 = arith.constant 0 : i32
    %c0_i32_1 = arith.constant 0 : i32
    return %arg0, %c0_i32, %c0_i32_0 : i32, i32, i32
  }
  func.func @transform_1(%arg0: i32) -> (i32, i32) {
    %c0_i32 = arith.constant 0 : i32
    %c0_i32_0 = arith.constant 0 : i32
    %c0_i32_1 = arith.constant 0 : i32
    return %c0_i32, %c0_i32_0 : i32, i32
  }
  func.func @transform_2(%arg0: i32) -> i32 {
    %c0_i32 = arith.constant 0 : i32
    %c0_i32_0 = arith.constant 0 : i32
    return %c0_i32 : i32
  }
  func.func @transform_3(%arg0: i32) -> (i32, i32) {
    %c0_i32 = arith.constant 0 : i32
    %c0_i32_0 = arith.constant 0 : i32
    return %arg0, %c0_i32 : i32, i32
  }
  func.func @transform_4(%arg0: i32) -> (i32, i32) {
    %c0_i32 = arith.constant 0 : i32
    %c0_i32_0 = arith.constant 0 : i32
    return %arg0, %c0_i32 : i32, i32
  }
}

</mosaic_0001>

<llo_original>
// kernel: tpu_custom_call.1
$region0: #{tpu_custom_call.1}
  #allocation0 [shape = 'u32[]', space=smem, size = 0x4, offset = 0x4, fixed_abs, tag = 'smem constant byte address 0x4 - core index']
  #allocation1 [shape = 'u32[144,128]{1,0:T(1,128)}', space=vmem, size = 0x12000, scoped, tag = 'internal scratch']
  #allocation2 [shape = 'f32[1]{0:T(128)S(6)}', space=smem, size = 0x200, scoped, tag = 'scoped memory for tpu_custom_call.1']
  %s0 = inlined_call_operand.hbm [shape: f32[2,8,32], index: 0, kind: input, shape index: {}]
  %s1 = inlined_call_operand.vmem [shape: f32[1,32], index: 1, kind: input, shape index: {}]
  %s2 = inlined_call_operand.<no memory space> [shape: f32[1], index: 2, kind: input, shape index: {}]
  %s3 = inlined_call_operand.vmem [shape: s32[2,8], index: 3, kind: input, shape index: {}]
  %s4 = inlined_call_operand.hbm [shape: f32[2,32], index: 4, kind: output, shape index: {}]
  %s5 = sld [smem:[#allocation0]]
  $region30: #{tpu_custom_call.1} parent=0
    _
  %s7 = ssub.s32 1, %s5
  %s8 = scalar_select 0, %s7, %s5
  %9 = sst [smem:[#allocation2]] %s2
  $region1: #{tpu_custom_call.1} parent=0
    #allocation3 [shape = 'u8[8192]{0}', space=vmem, size = 0x2000, scoped, tag = 'input window, operand 0, single buffered']
    #allocation4 [shape = 's32[1]{0}', space=sflag, size = 0x4, scoped, tag = 'scoped memory for tpu_custom_call.1']
    #allocation5 [shape = 's32[1]{0}', space=sflag, size = 0x4, scoped, tag = 'scoped memory for tpu_custom_call.1']
    #allocation6 [shape = 'u8[1024]{0}', space=vmem, size = 0x400, scoped, tag = 'output window, operand 0, single buffered']
    %10 = vsyncpa [#allocation4], 0
    %11 = vsyncpa [#allocation5], 0
    // Predicated region
    $region2: #{tpu_custom_call.1} parent=1 // pred_check
      _
    $region3: #{tpu_custom_call.1} parent=1 // pred_check_branch
      %13 = sbr.rel (0) target = $region5
    $region4: #{tpu_custom_call.1} parent=1 // pred_region
      %s15 = ssub.s32 256, 256
      %16 = vsyncadd [#allocation4], %s15
      %s17 = sshll.u32 [#allocation3], 4
      %s18 = int_to_ptr.vmem [resolvable:$true] %s17
      %23 = dma.hbm_to_vmem [thread:$0]  %s0, 256, %s18, [#allocation4], 128, 128, 8
    $region5: #{tpu_custom_call.1} parent=1 // pred_fallthru
      _
    // Predicated region
    $region6: #{tpu_custom_call.1} parent=1 // pred_check
      _
    $region7: #{tpu_custom_call.1} parent=1 // pred_check_branch
      %25 = sbr.rel (0) target = $region9
    $region8: #{tpu_custom_call.1} parent=1 // pred_region
      _
    $region9: #{tpu_custom_call.1} parent=1 // pred_fallthru
      _
    // Predicated region
    $region10: #{tpu_custom_call.1} parent=1 // pred_check
      _
    $region11: #{tpu_custom_call.1} parent=1 // pred_check_branch
      %27 = sbr.rel (0) target = $region13
    $region12: #{tpu_custom_call.1} parent=1 // pred_region
      _
    $region13: #{tpu_custom_call.1} parent=1 // pred_fallthru
      _
    // Predicated region
    $region14: #{tpu_custom_call.1} parent=1 // pred_check
      _
    $region15: #{tpu_custom_call.1} parent=1 // pred_check_branch
      %29 = sbr.rel (0) target = $region17
    $region16: #{tpu_custom_call.1} parent=1 // pred_region
      _
    $region17: #{tpu_custom_call.1} parent=1 // pred_fallthru
      _
    // Predicated region
    $region18: #{tpu_custom_call.1} parent=1 // pred_check
      _
    $region19: #{tpu_custom_call.1} parent=1 // pred_check_branch
      %31 = sbr.rel (0) target = $region21
    $region20: #{tpu_custom_call.1} parent=1 // pred_region
      %32 = dma.done [#allocation4], 256
    $region21: #{tpu_custom_call.1} parent=1 // pred_fallthru
      _
    %v33 = vld [vmem:[#allocation3] sm:$0xff]
    %v34 = vld [vmem:[#allocation3 + $0x8] sm:$0xff]
    %v35 = vld [vmem:[%s1] sm:$0x1]
    %v37 = vlaneseq
    %v38 = vshrl.u32 %v37, 7
    %v39 = vsub.s32 0, %v38
    %v40 = vrot.slane %v35, %v39
    %v42 = vmul.f32 %v33, %v40
    %v43 = vmul.f32 %v34, %v40
    %vm44 = vcmask 261120
    %v45 = vsel %vm44, %v42, 0.0
    %46 = vadd.xlane.f32.xlu0 %v45
    %v47 = vpop.xlane.xlu0 %46
    %v48 = vsel %vm44, %v43, 0.0
    %49 = vadd.xlane.f32.xlu0 %v48
    %v50 = vpop.xlane.xlu0 %49
    %s51 = sld [smem:[#allocation2]]
    %v52 = vstv %s51
    %v53 = vadd.f32 %v47, %v52
    %v54 = vadd.f32 %v50, %v52
    %v55 = vld [vmem:[%s3] sm:$0x3]
    %vm56 = vcmp.ne.s32.totalorder %v55, 0
    %v59 = vlaneseq
    %v60 = vand.u32 %v59, 127
    %v61 = vlaneseq
    %v62 = vshrl.u32 %v61, 7
    %v63 = vsub.s32 %v60, %v62
    %v64 = vrot.slane %v53, %v63
    %v65 = vlaneseq
    %v66 = vshrl.u32 %v65, 7
    %v67 = vsub.s32 %v60, %v66
    %v68 = vrot.slane %v54, %v67
    %vm69 = vcmask 1041409
    %v70 = vsel %vm69, %v68, %v64
    %v72 = vsel %vm56, %v70, -1e+30
    %vm73 = vcmask 58368
    %v74 = vsel %vm73, %v72, -inf
    %75 = vmax.xlane.f32.xlu0 %v74
    %v76 = vpop.xlane.xlu0 %75
    %v77 = vsub.f32 %v72, %v76
    %v78 = vmul.f32 %v77, 1.442695
    %v79 = vpow.pop %v78
    %v80 = vsel %vm73, %v79, 0.0
    %81 = vadd.xlane.f32.xlu0 %v80
    %v82 = vpop.xlane.xlu0 %81
    %v83 = vrcp.pop %v82
    %v84 = vmul.f32 %v79, %v83
    %v85 = vlaneseq
    %v86 = vshrl.u32 %v85, 7
    %v87 = vsub.s32 0, %v86
    %v88 = vrot.slane %v84, %v87
    %90 = vbcast.lane.b32.xlu0 %v88, 256
    %v91 = vpop.permute.xlu0 %90
    %v92 = vlaneseq
    %v93 = vshrl.u32 %v92, 7
    %v94 = vsub.s32 1, %v93
    %v95 = vrot.slane %v84, %v94
    %97 = vbcast.lane.b32.xlu0 %v95, 256
    %v98 = vpop.permute.xlu0 %97
    %v99 = vmul.f32 %v91, %v33
    %v100 = vmul.f32 %v98, %v34
    %v101 = vsel %vm44, %v99, 0.0
    %v102 = vrot.slane %v101, 4
    %v103 = vadd.f32 %v101, %v102
    %v104 = vrot.slane %v103, 2
    %v105 = vadd.f32 %v103, %v104
    %v106 = vrot.slane %v105, 1
    %v107 = vadd.f32 %v105, %v106
    %v108 = vsel %vm44, %v100, 0.0
    %v109 = vrot.slane %v108, 4
    %v110 = vadd.f32 %v108, %v109
    %v111 = vrot.slane %v110, 2
    %v112 = vadd.f32 %v110, %v111
    %v113 = vrot.slane %v112, 1
    %v114 = vadd.f32 %v112, %v113
    %v117 = vsel %vm69, %v114, %v107
    %vm119 = vcmask 254976
    %120 = vst.msk [vmem:[#allocation6] sm:$0x3] %vm119, %v117
    // Predicated region
    $region22: #{tpu_custom_call.1} parent=1 // pred_check
      _
    $region23: #{tpu_custom_call.1} parent=1 // pred_check_branch
      %122 = sbr.rel (0) target = $region25
    $region24: #{tpu_custom_call.1} parent=1 // pred_region
      %s124 = ssub.s32 32, 32
      %125 = vsyncadd [#allocation5], %s124
      %s127 = sshll.u32 [#allocation6], 4
      %s128 = int_to_ptr.vmem [resolvable:$true] %s127
      %130 = dma.vmem_to_hbm [thread:$0]  %s128, 32, %s4, [#allocation5]
    $region25: #{tpu_custom_call.1} parent=1 // pred_fallthru
      _
    // Predicated region
    $region26: #{tpu_custom_call.1} parent=1 // pred_check
      _
    $region27: #{tpu_custom_call.1} parent=1 // pred_check_branch
      %132 = sbr.rel (0) target = $region29
    $region28: #{tpu_custom_call.1} parent=1 // pred_region
      %133 = dma.done [#allocation5], 32
    $region29: #{tpu_custom_call.1} parent=1 // pred_fallthru
      _
    %134 = vsyncpa [#allocation4], 1
    %135 = vsyncpa [#allocation5], 1

</llo_original>
